<compile_context>
chip_gen: v7x
topology: tpu7x:2x2x1
jax: 0.10.0
libtpu: 0.0.40
codegen_flags: <defaults>
</compile_context>

<pallas_src>
import math
from functools import partial

import jax
import jax.numpy as jnp
from jax.experimental import pallas as pl
from jax.experimental.pallas import tpu as pltpu


# ---------------------------------------------------------------------------
# One-time buffer construction (mirror of PositionEncodingSine.__init__)
# ---------------------------------------------------------------------------
def make_pe(d_model=256, max_shape=(256, 256), temp_bug_fix=True):
    """Build the sinusoidal positional-encoding buffer: [1, d_model, H, W] f32."""
    H, W = max_shape
    ones = jnp.ones((H, W), dtype=jnp.float32)
    y_position = jnp.cumsum(ones, axis=0)[None]  # (1, H, W)
    x_position = jnp.cumsum(ones, axis=1)[None]  # (1, H, W)
    if temp_bug_fix:
        div_term = jnp.exp(
            jnp.arange(0, d_model // 2, 2, dtype=jnp.float32)
            * (-math.log(10000.0) / (d_model // 2))
        )
    else:
        # replicates the original (buggy) operator precedence: (-log(1e4)/d_model)//2
        div_term = jnp.exp(
            jnp.arange(0, d_model // 2, 2, dtype=jnp.float32)
            * (-math.log(10000.0) / d_model // 2)
        )
    div_term = div_term[:, None, None]  # (d_model//4, 1, 1)

    pe = jnp.zeros((d_model, H, W), dtype=jnp.float32)
    pe = pe.at[0::4, :, :].set(jnp.sin(x_position * div_term))
    pe = pe.at[1::4, :, :].set(jnp.cos(x_position * div_term))
    pe = pe.at[2::4, :, :].set(jnp.sin(y_position * div_term))
    pe = pe.at[3::4, :, :].set(jnp.cos(y_position * div_term))
    return pe[None]  # (1, d_model, H, W)


# ---------------------------------------------------------------------------
# Hardware-dependent budgets (v5e/v6e: 128 MiB VMEM, v7x: 64 MiB)
# ---------------------------------------------------------------------------
def _query_vmem_capacity():
    try:
        info = pltpu.get_tpu_info()
        cap = getattr(info, "vmem_capacity_bytes", None)
        if cap:
            return int(cap)
    except Exception:
        pass
    return 64 << 20  # conservative (v7x-sized) fallback


_VMEM_CAP = _query_vmem_capacity()
if _VMEM_CAP >= 100 << 20:          # v5e / v6e (128 MiB physical VMEM)
    _TOTAL_BUF_BUDGET = 40 << 20    # all double-buffered tiles together
    _VMEM_LIMIT = 64 << 20
else:                               # v7x (64 MiB physical VMEM) or unknown
    _TOTAL_BUF_BUDGET = 24 << 20
    _VMEM_LIMIT = 32 << 20


# ---------------------------------------------------------------------------
# Pallas kernel: native-layout elementwise add, pe broadcast over batch
# ---------------------------------------------------------------------------
def _add_pe_kernel(x_ref, pe_ref, o_ref):
    # x_ref/o_ref: (tc, th, W) tile of one batch element (batch dim squeezed)
    # pe_ref:      (tc, th, W) tile, identical for every batch element
    o_ref[...] = (x_ref[...].astype(jnp.float32) + pe_ref[...]).astype(o_ref.dtype)


def _choose_tiles(C, H, W, x_isz, out_isz):
    """Pick (channel_tile, height_tile); W is always taken full-extent (lane dim)."""
    # Double-buffered: x tile + pe tile (f32) + out tile.
    per_elem = 2 * (x_isz + 4 + out_isz)
    max_elems = max(1, _TOTAL_BUF_BUDGET // per_elem)
    # Sublane alignment for the second-minor (H) dim, covering packed dtypes.
    a = max(8, 32 // x_isz, 32 // out_isz)

    if H % a != 0:
        # H cannot be split (block second-minor must be a-aligned or full H).
        th = H
        tc = min(C, max(1, max_elems // (H * W)))
    elif C * H * W <= max_elems:
        tc, th = C, H
    else:
        th_max = max_elems // (C * W)
        if th_max >= a:
            tc = C
            th = min(H, (th_max // a) * a)
        else:
            th = a
            tc = min(C, max(1, max_elems // (a * W)))

    # Guarantee >= 2 parallel grid steps so both TensorCores (v7x) get work;
    # the extra ~0.35us grid-step overhead is negligible everywhere else.
    if pl.cdiv(C, tc) * pl.cdiv(H, th) == 1:
        if H % a == 0 and H >= 2 * a:
            th = a * ((H // a + 1) // 2)
        elif C >= 2:
            tc = (C + 1) // 2
    return tc, th


def _add_pe_fwd(x, pe3, *, donate):
    """out = x + pe3[None], pe3: (C, H, W) f32, x: (N, C, H, W)."""
    N, C, H, W = x.shape
    out_dtype = jnp.result_type(x.dtype, jnp.float32)  # match torch promotion (pe is f32)
    donate = donate and (out_dtype == x.dtype)
    x_isz = jnp.dtype(x.dtype).itemsize
    o_isz = jnp.dtype(out_dtype).itemsize
    tc, th = _choose_tiles(C, H, W, x_isz, o_isz)

    # Batch innermost + "arbitrary": pe block index is constant across n, so the pe
    # tile stays resident in VMEM across the batch loop (no per-batch re-DMA).
    grid = (pl.cdiv(C, tc), pl.cdiv(H, th), N)

    return pl.pallas_call(
        _add_pe_kernel,
        out_shape=jax.ShapeDtypeStruct((N, C, H, W), out_dtype),
        grid=grid,
        in_specs=[
            # x: one (tc, th, W) tile of one batch element per step, native 4D layout.
            pl.BlockSpec((None, tc, th, W), lambda c, h, n: (n, c, h, 0)),
            # pe: same (tc, th, W) tile for every batch element.
            pl.BlockSpec((tc, th, W), lambda c, h, n: (c, h, 0)),
        ],
        out_specs=pl.BlockSpec((None, tc, th, W), lambda c, h, n: (n, c, h, 0)),
        input_output_aliases=({0: 0} if donate else {}),
        compiler_params=pltpu.CompilerParams(
            dimension_semantics=("parallel", "parallel", "arbitrary"),
            vmem_limit_bytes=_VMEM_LIMIT,
        ),
    )(x, pe3)


# Jitted entry points (single device program; donation reuses the real input buffer).
_add_pe_jit = jax.jit(partial(_add_pe_fwd, donate=False))
_add_pe_jit_donated = jax.jit(partial(_add_pe_fwd, donate=True), donate_argnums=(0,))


# ---------------------------------------------------------------------------
# Module-like wrapper with pe-slab caching
# ---------------------------------------------------------------------------
class PositionEncodingSine:
    def __init__(self, d_model=256, max_shape=(256, 256), temp_bug_fix=True):
        self.d_model = d_model
        self.max_shape = max_shape
        self.pe = make_pe(d_model, max_shape, temp_bug_fix)  # (1, d_model, Hmax, Wmax) f32
        self._pe_cache = {}  # (C, H, W) -> (C, H, W) f32 slab

    def _pe_slab(self, C, H, W):
        key = (C, H, W)
        if key not in self._pe_cache:
            self._pe_cache[key] = self.pe[0, :C, :H, :W]  # stays f32, like the torch buffer
        return self._pe_cache[key]

    def __call__(self, x, *, donate_x=False):
        N, C, H, W = x.shape
        pe3 = self._pe_slab(C, H, W)
        out_dtype = jnp.result_type(x.dtype, jnp.float32)
        if donate_x and out_dtype == x.dtype:
            return _add_pe_jit_donated(x, pe3)
        return _add_pe_jit(x, pe3)


if __name__ == "__main__":
    # Small shapes consistent with the module: d_model=8, max_shape=(32, 32),
    # input x of shape [N=2, C=8, H=16, W=16].
    d_model = 8
    max_shape = (32, 32)
    enc = PositionEncodingSine(d_model=d_model, max_shape=max_shape, temp_bug_fix=True)

    key = jax.random.PRNGKey(0)
    k1, k2 = jax.random.split(key)

    N, C, H, W = 2, 8, 16, 16
    x = jax.random.normal(k1, (N, C, H, W), dtype=jnp.float32)

    out = jax.block_until_ready(enc(x))
    ref = x + enc.pe[:, :C, :H, :W]
    assert out.shape == (N, C, H, W)
    assert out.dtype == ref.dtype
    assert jnp.allclose(out, ref, atol=1e-6, rtol=1e-6)

    # Second config: batch 1, non-8/128-aligned spatial extent (full-extent H/W blocks,
    # C split to keep >=2 parallel grid steps); exercises a second pe-cache entry.
    x2 = jax.random.normal(k2, (1, 8, 12, 20), dtype=jnp.float32)
    out2 = jax.block_until_ready(enc(x2))
    ref2 = x2 + enc.pe[:, :8, :12, :20]
    assert jnp.allclose(out2, ref2, atol=1e-6, rtol=1e-6)

    print("KERNEL_OK")
</pallas_src>

<mosaic_0001>
module attributes {stable_mosaic.version = 11 : i64} {
  func.func @_add_pe_kernel(%arg0: i32, %arg1: i32, %arg2: i32, %arg3: memref<1x8x8x16xf32, #tpu.memory_space<vmem>>, %arg4: memref<8x8x16xf32, #tpu.memory_space<vmem>>, %arg5: memref<1x8x8x16xf32, #tpu.memory_space<vmem>>) attributes {dimension_semantics = [#tpu.dimension_semantics<parallel>, #tpu.dimension_semantics<parallel>, #tpu.dimension_semantics<arbitrary>], iteration_bounds = array<i64: 1, 2, 2>, scalar_prefetch = 0 : i64, scratch_operands = 0 : i64, tpu.core_type = #tpu.core_type<tc>, window_params = [{transform_indices = @transform_0, window_bounds = array<i64: 1, 8, 8, 16>}, {transform_indices = @transform_1, window_bounds = array<i64: 8, 8, 16>}, {transform_indices = @transform_2, window_bounds = array<i64: 1, 8, 8, 16>}]} {
    %c0 = arith.constant 0 : index
    %c0_0 = arith.constant 0 : index
    %c0_1 = arith.constant 0 : index
    %c0_2 = arith.constant 0 : index
    %0 = vector.load %arg3[%c0, %c0_0, %c0_1, %c0_2] : memref<1x8x8x16xf32, #tpu.memory_space<vmem>>, vector<1x8x8x16xf32>
    %1 = vector.shape_cast %0 : vector<1x8x8x16xf32> to vector<8x8x16xf32>
    %c0_3 = arith.constant 0 : index
    %c0_4 = arith.constant 0 : index
    %c0_5 = arith.constant 0 : index
    %2 = vector.load %arg4[%c0_3, %c0_4, %c0_5] : memref<8x8x16xf32, #tpu.memory_space<vmem>>, vector<8x8x16xf32>
    %3 = arith.addf %1, %2 : vector<8x8x16xf32>
    %c0_6 = arith.constant 0 : index
    %c0_7 = arith.constant 0 : index
    %c0_8 = arith.constant 0 : index
    %c0_9 = arith.constant 0 : index
    %4 = vector.load %arg5[%c0_6, %c0_7, %c0_8, %c0_9] : memref<1x8x8x16xf32, #tpu.memory_space<vmem>>, vector<1x8x8x16xf32>
    %5 = vector.shape_cast %4 : vector<1x8x8x16xf32> to vector<8x8x16xf32>
    %6 = vector.shape_cast %3 : vector<8x8x16xf32> to vector<1x8x8x16xf32>
    tpu.vector_store %arg5[%c0_6, %c0_7, %c0_8, %c0_9], %6 {strides = array<i32>} : memref<1x8x8x16xf32, #tpu.memory_space<vmem>>, vector<1x8x8x16xf32>,
    return
  }
  func.func @transform_0(%arg0: i32, %arg1: i32, %arg2: i32) -> (i32, i32, i32, i32) {
    %c0_i32 = arith.constant 0 : i32
    %c0_i32_0 = arith.constant 0 : i32
    return %arg2, %arg0, %arg1, %c0_i32 : i32, i32, i32, i32
  }
  func.func @transform_1(%arg0: i32, %arg1: i32, %arg2: i32) -> (i32, i32, i32) {
    %c0_i32 = arith.constant 0 : i32
    %c0_i32_0 = arith.constant 0 : i32
    return %arg0, %arg1, %c0_i32 : i32, i32, i32
  }
  func.func @transform_2(%arg0: i32, %arg1: i32, %arg2: i32) -> (i32, i32, i32, i32) {
    %c0_i32 = arith.constant 0 : i32
    %c0_i32_0 = arith.constant 0 : i32
    return %arg2, %arg0, %arg1, %c0_i32 : i32, i32, i32, i32
  }
}

</mosaic_0001>

<llo_original>
// kernel: _add_pe_fwd.1
$region0: #{_add_pe_fwd.1}
  #allocation0 [shape = 'u32[]', space=smem, size = 0x4, offset = 0x4, fixed_abs, tag = 'smem constant byte address 0x4 - core index']
  #allocation1 [shape = 'u32[144,128]{1,0:T(1,128)}', space=vmem, size = 0x12000, scoped, tag = 'internal scratch']
  %s0 = inlined_call_operand.hbm [shape: f32[2,8,16,16], index: 0, kind: input, shape index: {}]
  %s1 = inlined_call_operand.hbm [shape: f32[8,16,16], index: 1, kind: input, shape index: {}]
  %s2 = inlined_call_operand.hbm [shape: f32[2,8,16,16], index: 2, kind: output, shape index: {}]
  %s3 = sld [smem:[#allocation0]]
  $region49: #{_add_pe_fwd.1} parent=0
    _
  %s5 = ssub.s32 1, %s3
  %s6 = scalar_select 0, %s5, %s3
  $region1: #{_add_pe_fwd.1} parent=0
    #allocation2 [shape = 'u8[65536]{0}', space=vmem, size = 0x10000, scoped, tag = 'input window, operand 0']
    #allocation3 [shape = 's32[2]{0}', space=sflag, size = 0x8, scoped, tag = 'scoped memory for _add_pe_fwd.1']
    #allocation4 [shape = 's32[2]{0}', space=sflag, size = 0x8, scoped, tag = 'scoped memory for _add_pe_fwd.1']
    #allocation5 [shape = 'u8[65536]{0}', space=vmem, size = 0x10000, scoped, tag = 'input window, operand 1']
    #allocation6 [shape = 's32[2]{0}', space=sflag, size = 0x8, scoped, tag = 'scoped memory for _add_pe_fwd.1']
    #allocation7 [shape = 'u8[65536]{0}', space=vmem, size = 0x10000, scoped, tag = 'output window, operand 0']
    %7 = vsyncpa [#allocation3], 0
    %s8 = scalar_lea.sflag [#allocation3], 1
    %9 = vsyncpa %s8, 0
    %10 = vsyncpa [#allocation6], 0
    %s11 = scalar_lea.sflag [#allocation6], 1
    %12 = vsyncpa %s11, 0
    %13 = vsyncpa [#allocation4], 0
    %s14 = scalar_lea.sflag [#allocation4], 1
    %15 = vsyncpa %s14, 0
    loop: start=0, step=1, limit=6
    $region2: #{_add_pe_fwd.1} parent=1 // loop_pre_header
      _
    $region3: #{_add_pe_fwd.1} parent=1 // loop_header
      %s17 = sphi 0, %s21
      %p18 = scmp.ge.s32.totalorder %s17, 6
      %s24 = sphi 0, %s43
      %s25 = sphi 0, %s39
      %s26 = sphi 0, %s35
      %s27 = sphi 0, %s24
      %s28 = sphi 0, %s25
      %s29 = sphi 0, %s26
      %s30 = sphi 0, %s27
      %s31 = sphi 0, %s28
      %s32 = sphi 0, %s29
      %s50 = sphi 0, %s52
      %s53 = sphi 0, %s50
      %s54 = sphi 0, %s53
      %s70 = sphi 0, %s54
      %s78 = sphi 0, %s80
      %s81 = sphi 0, %s78
      %s82 = sphi 0, %s81
      %s98 = sphi 0, %s82
      %s108 = sphi 0, %s110
      %s111 = sphi 0, %s108
      %s112 = sphi 0, %s111
      %s128 = sphi 0, %s112
    $region4: #{_add_pe_fwd.1} parent=1 // loop_header_branch
      %20 = sbr.rel (%p18) target = $region8
    $region5: #{_add_pe_fwd.1} parent=1 // loop_body
      %s22 = ssub.s32 %s17, 1
      %s23 = ssub.s32 %s17, 2
      %s33 = sadd.s32 1, %s26
      %p34 = scmp.ge.s32.totalorder %s33, 2
      %s35 = scalar_select %p34, 0, %s33
      %s36 = sadd.s32 1, %s25
      %s37 = scalar_select %p34, %s36, %s25
      %p38 = scmp.ge.s32.totalorder %s37, 2
      %s39 = scalar_select %p38, 0, %s37
      %s40 = sadd.s32 1, %s24
      %s41 = scalar_select %p38, %s40, %s24
      %p42 = scmp.ge.s32.totalorder %s41, 1
      %s43 = scalar_select %p42, 0, %s41
      %s44 = ssub.s32 %s26, %s35
      %s45 = ssub.s32 %s24, %s43
      %s46 = sor.u32 %s44, %s45
      %s47 = ssub.s32 %s25, %s39
      %s48 = sor.u32 %s46, %s47
      %p49 = scmp.eq.s32.totalorder %s48, 0
      %s51 = sadd.s32 %s50, 1
      %s52 = scalar_select %p49, %s50, %s51
      %p55 = pneg %p49
      %p56 = scmp.eq.s32.totalorder %s17, 3
      %p57 = por %p55, %p56
      %p58 = scmp.ne.s32.totalorder %s50, %s53
      %p59 = scmp.eq.s32.totalorder %s17, 0
      %p60 = por %p58, %p59
      %p61 = scmp.ne.s32.totalorder %s50, %s53
      %p62 = scmp.eq.s32.totalorder %s22, 3
      %p63 = por %p61, %p62
      %p64 = scmp.ne.s32.totalorder %s53, %s54
      %p65 = scmp.eq.s32.totalorder %s22, 0
      %p66 = por %p64, %p65
      %p67 = scmp.ne.s32.totalorder %s53, %s54
      %p68 = scmp.eq.s32.totalorder %s23, 3
      %p69 = por %p67, %p68
      %p71 = scmp.ne.s32.totalorder %s54, %s70
      %p72 = scmp.eq.s32.totalorder %s23, 0
      %p73 = por %p71, %p72
      %s74 = ssub.s32 %s24, %s43
      %s75 = ssub.s32 %s25, %s39
      %s76 = sor.u32 %s74, %s75
      %p77 = scmp.eq.s32.totalorder %s76, 0
      %s79 = sadd.s32 %s78, 1
      %s80 = scalar_select %p77, %s78, %s79
      %p83 = pneg %p77
      %p84 = scmp.eq.s32.totalorder %s17, 3
      %p85 = por %p83, %p84
      %p86 = scmp.ne.s32.totalorder %s78, %s81
      %p87 = scmp.eq.s32.totalorder %s17, 0
      %p88 = por %p86, %p87
      %p89 = scmp.ne.s32.totalorder %s78, %s81
      %p90 = scmp.eq.s32.totalorder %s22, 3
      %p91 = por %p89, %p90
      %p92 = scmp.ne.s32.totalorder %s81, %s82
      %p93 = scmp.eq.s32.totalorder %s22, 0
      %p94 = por %p92, %p93
      %p95 = scmp.ne.s32.totalorder %s81, %s82
      %p96 = scmp.eq.s32.totalorder %s23, 3
      %p97 = por %p95, %p96
      %p99 = scmp.ne.s32.totalorder %s82, %s98
      %p100 = scmp.eq.s32.totalorder %s23, 0
      %p101 = por %p99, %p100
      %s102 = ssub.s32 %s26, %s35
      %s103 = ssub.s32 %s24, %s43
      %s104 = sor.u32 %s102, %s103
      %s105 = ssub.s32 %s25, %s39
      %s106 = sor.u32 %s104, %s105
      %p107 = scmp.eq.s32.totalorder %s106, 0
      %s109 = sadd.s32 %s108, 1
      %s110 = scalar_select %p107, %s108, %s109
      %p113 = pneg %p107
      %p114 = scmp.eq.s32.totalorder %s17, 3
      %p115 = por %p113, %p114
      %p116 = scmp.ne.s32.totalorder %s108, %s111
      %p117 = scmp.eq.s32.totalorder %s17, 0
      %p118 = por %p116, %p117
      %p119 = scmp.ne.s32.totalorder %s108, %s111
      %p120 = scmp.eq.s32.totalorder %s22, 3
      %p121 = por %p119, %p120
      %p122 = scmp.ne.s32.totalorder %s111, %s112
      %p123 = scmp.eq.s32.totalorder %s22, 0
      %p124 = por %p122, %p123
      %p125 = scmp.ne.s32.totalorder %s111, %s112
      %p126 = scmp.eq.s32.totalorder %s23, 3
      %p127 = por %p125, %p126
      %p129 = scmp.ne.s32.totalorder %s112, %s128
      %p130 = scmp.eq.s32.totalorder %s23, 0
      %p131 = por %p129, %p130
      %p132 = scmp.le.s32.totalorder 1, %s17
      %p133 = scmp.lt.s32.totalorder %s17, 5
      %p134 = pnand %p132, %p133
      %p135 = pneg %p134
      // Predicated region
      $region9: #{_add_pe_fwd.1} parent=5 // pred_check
        _
      $region10: #{_add_pe_fwd.1} parent=5 // pred_check_branch
        %137 = sbr.rel (%p134) target = $region12
      $region11: #{_add_pe_fwd.1} parent=5 // pred_region
        %s138 = ssub.s32 %s17, 1
      $region12: #{_add_pe_fwd.1} parent=5 // pred_fallthru
        _
      %p139 = scmp.lt.s32.totalorder %s17, 4
      // Predicated region
      $region13: #{_add_pe_fwd.1} parent=5 // pred_check
        %p140 = pneg %p139
      $region14: #{_add_pe_fwd.1} parent=5 // pred_check_branch
        %142 = sbr.rel (%p140) target = $region16
      $region15: #{_add_pe_fwd.1} parent=5 // pred_region
        // Predicated region
        $region17: #{_add_pe_fwd.1} parent=15 // pred_check
          %p143 = pneg %p60
        $region18: #{_add_pe_fwd.1} parent=15 // pred_check_branch
          %145 = sbr.rel (%p143) target = $region20
        $region19: #{_add_pe_fwd.1} parent=15 // pred_region
          %s146 = sand.u32 %s50, 1
          %s147 = scalar_lea.sflag [#allocation3], %s146
          %s148 = sand.u32 %s50, 1
          %s149 = smul.addr %s148, 64
          %s150 = scalar_lea.vmem [#allocation2], %s149
          %s151 = smul.u32 8, %s24
          %s153 = ssub.s32 1024, 1024
          %154 = vsyncadd %s147, %s153
          %s155 = smul.addr %s151, 2
          %s156 = sadd.s32 %s25, %s155
          %s157 = smul.addr %s26, 16
          %s158 = sadd.s32 %s156, %s157
          %s159 = smul.addr %s158, 128
          %s160 = scalar_lea.hbm %s0, %s159
          %s161 = sshll.u32 %s150, 4
          %s162 = int_to_ptr.vmem [resolvable:$true] %s161
          %167 = dma.hbm_to_vmem [thread:$0]  %s160, 1024, %s162, %s147, 256, 128, 8
        $region20: #{_add_pe_fwd.1} parent=15 // pred_fallthru
          _
        // Predicated region
        $region21: #{_add_pe_fwd.1} parent=15 // pred_check
          %p168 = pneg %p88
        $region22: #{_add_pe_fwd.1} parent=15 // pred_check_branch
          %170 = sbr.rel (%p168) target = $region24
        $region23: #{_add_pe_fwd.1} parent=15 // pred_region
          %s171 = sand.u32 %s78, 1
          %s172 = scalar_lea.sflag [#allocation6], %s171
          %s173 = sand.u32 %s78, 1
          %s174 = smul.addr %s173, 64
          %s175 = scalar_lea.vmem [#allocation5], %s174
          %s176 = smul.u32 8, %s24
          %s178 = ssub.s32 1024, 1024
          %179 = vsyncadd %s172, %s178
          %s180 = smul.addr %s176, 2
          %s181 = sadd.s32 %s25, %s180
          %s182 = smul.addr %s181, 128
          %s183 = scalar_lea.hbm %s1, %s182
          %s184 = sshll.u32 %s175, 4
          %s185 = int_to_ptr.vmem [resolvable:$true] %s184
          %190 = dma.hbm_to_vmem [thread:$0]  %s183, 1024, %s185, %s172, 256, 128, 8
        $region24: #{_add_pe_fwd.1} parent=15 // pred_fallthru
          _
      $region16: #{_add_pe_fwd.1} parent=5 // pred_fallthru
        _
      %p191 = scmp.le.s32.totalorder 1, %s17
      %p192 = scmp.lt.s32.totalorder %s17, 5
      %p193 = pnand %p191, %p192
      %p194 = pneg %p193
      // Predicated region
      $region25: #{_add_pe_fwd.1} parent=5 // pred_check
        _
      $region26: #{_add_pe_fwd.1} parent=5 // pred_check_branch
        %196 = sbr.rel (%p193) target = $region28
      $region27: #{_add_pe_fwd.1} parent=5 // pred_region
        %s197 = ssub.s32 %s17, 1
        %s198 = sand.u32 %s53, 1
        %s199 = scalar_lea.sflag [#allocation3], %s198
        %s200 = sand.u32 %s53, 1
        %s201 = smul.addr %s200, 64
        %s202 = scalar_lea.vmem [#allocation2], %s201
        // Predicated region
        $region29: #{_add_pe_fwd.1} parent=27 // pred_check
          %p203 = pneg %p66
        $region30: #{_add_pe_fwd.1} parent=27 // pred_check_branch
          %205 = sbr.rel (%p203) target = $region32
        $region31: #{_add_pe_fwd.1} parent=27 // pred_region
          %206 = dma.done %s199, 1024
        $region32: #{_add_pe_fwd.1} parent=27 // pred_fallthru
          _
        %s207 = sand.u32 %s81, 1
        %s208 = scalar_lea.sflag [#allocation6], %s207
        %s209 = sand.u32 %s81, 1
        %s210 = smul.addr %s209, 64
        %s211 = scalar_lea.vmem [#allocation5], %s210
        // Predicated region
        $region33: #{_add_pe_fwd.1} parent=27 // pred_check
          %p212 = pneg %p94
        $region34: #{_add_pe_fwd.1} parent=27 // pred_check_branch
          %214 = sbr.rel (%p212) target = $region36
        $region35: #{_add_pe_fwd.1} parent=27 // pred_region
          %215 = dma.done %s208, 1024
        $region36: #{_add_pe_fwd.1} parent=27 // pred_fallthru
          _
        %s216 = sand.u32 %s53, 1
        %s217 = scalar_lea.sflag [#allocation3], %s216
        %s218 = sand.u32 %s53, 1
        %s219 = smul.addr %s218, 64
        %s220 = scalar_lea.vmem [#allocation2], %s219
        %p221 = pneg %p66
        %p222 = pneg %p63
        %s223 = sand.u32 %s81, 1
        %s224 = scalar_lea.sflag [#allocation6], %s223
        %s225 = sand.u32 %s81, 1
        %s226 = smul.addr %s225, 64
        %s227 = scalar_lea.vmem [#allocation5], %s226
        %p228 = pneg %p94
        %p229 = pneg %p91
        %p230 = pneg %p124
        %p231 = pneg %p121
        %s232 = sand.u32 %s111, 1
        %s233 = scalar_lea.sflag [#allocation4], %s232
        %s234 = sand.u32 %s111, 1
        %s235 = smul.addr %s234, 64
        %s236 = scalar_lea.vmem [#allocation7], %s235
        %s237 = smul.u32 8, %s27
        %s238 = smul.u32 8, %s27
        %s239 = smul.u32 8, %s27
        %v240 = vld [vmem:[%s202] sm:$0xff]
        %v241 = vld [vmem:[%s202 + $0x8] sm:$0xff]
        %v242 = vld [vmem:[%s202 + $0x10] sm:$0xff]
        %v243 = vld [vmem:[%s202 + $0x18] sm:$0xff]
        %v244 = vld [vmem:[%s202 + $0x20] sm:$0xff]
        %v245 = vld [vmem:[%s202 + $0x28] sm:$0xff]
        %v246 = vld [vmem:[%s202 + $0x30] sm:$0xff]
        %v247 = vld [vmem:[%s202 + $0x38] sm:$0xff]
        %v248 = vld [vmem:[%s211] sm:$0xff]
        %v249 = vld [vmem:[%s211 + $0x8] sm:$0xff]
        %v250 = vld [vmem:[%s211 + $0x10] sm:$0xff]
        %v251 = vld [vmem:[%s211 + $0x18] sm:$0xff]
        %v252 = vld [vmem:[%s211 + $0x20] sm:$0xff]
        %v253 = vld [vmem:[%s211 + $0x28] sm:$0xff]
        %v254 = vld [vmem:[%s211 + $0x30] sm:$0xff]
        %v255 = vld [vmem:[%s211 + $0x38] sm:$0xff]
        %v256 = vadd.f32 %v240, %v248
        %v257 = vadd.f32 %v241, %v249
        %v258 = vadd.f32 %v242, %v250
        %v259 = vadd.f32 %v243, %v251
        %v260 = vadd.f32 %v244, %v252
        %v261 = vadd.f32 %v245, %v253
        %v262 = vadd.f32 %v246, %v254
        %v263 = vadd.f32 %v247, %v255
        %vm264 = vcmask 130048
        %265 = vst.msk [vmem:[%s236] sm:$0xff] %vm264, %v256
        %266 = vst.msk [vmem:[%s236 + $0x8] sm:$0xff] %vm264, %v257
        %267 = vst.msk [vmem:[%s236 + $0x10] sm:$0xff] %vm264, %v258
        %268 = vst.msk [vmem:[%s236 + $0x18] sm:$0xff] %vm264, %v259
        %269 = vst.msk [vmem:[%s236 + $0x20] sm:$0xff] %vm264, %v260
        %270 = vst.msk [vmem:[%s236 + $0x28] sm:$0xff] %vm264, %v261
        %271 = vst.msk [vmem:[%s236 + $0x30] sm:$0xff] %vm264, %v262
        %272 = vst.msk [vmem:[%s236 + $0x38] sm:$0xff] %vm264, %v263
        %s273 = sand.u32 %s111, 1
        %s274 = scalar_lea.sflag [#allocation4], %s273
        %s275 = sand.u32 %s111, 1
        %s276 = smul.addr %s275, 64
        %s277 = scalar_lea.vmem [#allocation7], %s276
        // Predicated region
        $region37: #{_add_pe_fwd.1} parent=27 // pred_check
          %p278 = pneg %p121
        $region38: #{_add_pe_fwd.1} parent=27 // pred_check_branch
          %280 = sbr.rel (%p278) target = $region40
        $region39: #{_add_pe_fwd.1} parent=27 // pred_region
          %s281 = smul.u32 8, %s27
          %s283 = ssub.s32 1024, 1024
          %284 = vsyncadd %s274, %s283
          %s285 = smul.addr %s281, 2
          %s286 = sadd.s32 %s28, %s285
          %s287 = smul.addr %s29, 16
          %s288 = sadd.s32 %s286, %s287
          %s289 = smul.addr %s288, 128
          %s290 = scalar_lea.hbm %s2, %s289
          %s291 = sshll.u32 %s277, 4
          %s292 = int_to_ptr.vmem [resolvable:$true] %s291
          %297 = dma.vmem_to_hbm [thread:$0]  %s292, 1024, %s290, %s274, 128, 256, 8
        $region40: #{_add_pe_fwd.1} parent=27 // pred_fallthru
          _
      $region28: #{_add_pe_fwd.1} parent=5 // pred_fallthru
        _
      %p298 = scmp.le.s32.totalorder 2, %s17
      // Predicated region
      $region41: #{_add_pe_fwd.1} parent=5 // pred_check
        %p299 = pneg %p298
      $region42: #{_add_pe_fwd.1} parent=5 // pred_check_branch
        %301 = sbr.rel (%p299) target = $region44
      $region43: #{_add_pe_fwd.1} parent=5 // pred_region
        %s302 = ssub.s32 %s17, 2
        // Predicated region
        $region45: #{_add_pe_fwd.1} parent=43 // pred_check
          %p303 = pneg %p127
        $region46: #{_add_pe_fwd.1} parent=43 // pred_check_branch
          %305 = sbr.rel (%p303) target = $region48
        $region47: #{_add_pe_fwd.1} parent=43 // pred_region
          %s306 = sand.u32 %s112, 1
          %s307 = scalar_lea.sflag [#allocation4], %s306
          %s308 = sand.u32 %s112, 1
          %s309 = smul.addr %s308, 64
          %s310 = scalar_lea.vmem [#allocation7], %s309
          %311 = dma.done %s307, 1024
        $region48: #{_add_pe_fwd.1} parent=43 // pred_fallthru
          _
      $region44: #{_add_pe_fwd.1} parent=5 // pred_fallthru
        _
    $region6: #{_add_pe_fwd.1} parent=1 // loop_footer
      %s21 = sadd.s32 1, %s17
    $region7: #{_add_pe_fwd.1} parent=1 // loop_footer_branch
      %16 = sbr.rel target = $region3
    $region8: #{_add_pe_fwd.1} parent=1 // loop_exit
      _
    %312 = vsyncpa [#allocation3], 1
    %s313 = scalar_lea.sflag [#allocation3], 1
    %314 = vsyncpa %s313, 1
    %315 = vsyncpa [#allocation6], 1
    %s316 = scalar_lea.sflag [#allocation6], 1
    %317 = vsyncpa %s316, 1
    %318 = vsyncpa [#allocation4], 1
    %s319 = scalar_lea.sflag [#allocation4], 1
    %320 = vsyncpa %s319, 1

</llo_original>
